<compile_context>
chip_gen: v7x
topology: tpu7x:2x2x1
jax: 0.10.0
libtpu: 0.0.40
codegen_flags: <defaults>
</compile_context>

<pallas_src>
import functools

import jax
import jax.numpy as jnp
import numpy as np
from jax.experimental import pallas as pl
from jax.experimental.pallas import tpu as pltpu


def _distance_kernel(pts_ref, prm_ref, tab_ref, dss_ref, nss_ref,
                     *, gx_dim, gy_dim, gz_dim, eps):
    p = pts_ref[0]              # (3, TN)  x/y/z on sublanes, points lane-dense
    prm = prm_ref[0]            # (3, 3)   columns = [first, coef, max_limit]
    tab = tab_ref[0]            # (4*Gz, Gx*Gy) precomputed shifted xy-row table

    tn = p.shape[1]
    n_rows = gx_dim * gy_dim

    first = prm[:, 0:1]         # (3, 1)
    coef = prm[:, 1:2]
    maxl = prm[:, 2:3]

    # frac = clamp(min((p - first) * coef, max_limit), min=0)
    frac = jnp.maximum(jnp.minimum((p - first) * coef, maxl), 0.0)   # (3, TN)
    fl = jnp.floor(frac)

    # Clamp the base corner so the +1 corner stays in range (robust even if a
    # caller passes max_limit == Gdim-1); frac parts re-derived from the
    # clamped base so the boundary value is still interpolated correctly.
    bx = jnp.clip(fl[0:1, :], 0.0, float(gx_dim - 2))
    by = jnp.clip(fl[1:2, :], 0.0, float(gy_dim - 2))
    bz = jnp.clip(fl[2:3, :], 0.0, float(gz_dim - 2))
    fx = frac[0:1, :] - bx
    fy = frac[1:2, :] - by
    fz = frac[2:3, :] - bz

    ix = bx.astype(jnp.int32)
    iy = by.astype(jnp.int32)
    iz = bz.astype(jnp.int32)

    # ---- Stage 1 (MXU): gather the four (x+di, y+dj, :) z-rows per point ----
    # rows[m*Gz + z, n] = grid[ix_n + di_m, iy_n + dj_m, z],  m = di*2 + dj
    rbase = ix * gy_dim + iy                                        # (1, TN)
    row_iota = jax.lax.broadcasted_iota(jnp.int32, (n_rows, tn), 0)
    onehot_rows = (row_iota == rbase).astype(jnp.float32)           # (GxGy, TN)
    rows = jnp.dot(tab, onehot_rows, preferred_element_type=jnp.float32)

    # ---- Stage 2 (VPU/XLU, small): pick z and z+1 from each fetched row ----
    z_iota = jax.lax.broadcasted_iota(jnp.int32, (gz_dim, tn), 0)
    oz0 = (z_iota == iz).astype(jnp.float32)                        # (Gz, TN)
    oz1 = (z_iota == iz + 1).astype(jnp.float32)

    c = [[[None, None], [None, None]], [[None, None], [None, None]]]
    for i in range(2):
        for j in range(2):
            m = i * 2 + j
            r_m = rows[m * gz_dim:(m + 1) * gz_dim, :]              # (Gz, TN)
            c[i][j][0] = jnp.sum(r_m * oz0, axis=0, keepdims=True)  # (1, TN)
            c[i][j][1] = jnp.sum(r_m * oz1, axis=0, keepdims=True)

    wx = (1.0 - fx, fx)
    wy = (1.0 - fy, fy)
    wz = (1.0 - fz, fz)

    # Trilinear interpolation of the SDF value (interp3d_batch, grad=False).
    d = jnp.zeros((1, tn), jnp.float32)
    for i in range(2):
        for j in range(2):
            for k in range(2):
                d = d + wx[i] * wy[j] * wz[k] * c[i][j][k]

    # Finite-difference gradient components (interp3d_batch with grad=True and
    # the two swap_index_batch permutations), re-using the 8 corner values.
    gxv = jnp.zeros((1, tn), jnp.float32)
    gyv = jnp.zeros((1, tn), jnp.float32)
    gzv = jnp.zeros((1, tn), jnp.float32)
    for a in range(2):
        for b in range(2):
            gzv = gzv + wx[a] * wy[b] * (c[a][b][1] - c[a][b][0])
            gyv = gyv + wx[a] * wz[b] * (c[a][1][b] - c[a][0][b])
            gxv = gxv + wy[a] * wz[b] * (c[1][a][b] - c[0][a][b])

    normal = jnp.concatenate([gxv, gyv, gzv], axis=0)               # (3, TN)
    norm2 = gxv * gxv + gyv * gyv + gzv * gzv
    inv = jax.lax.rsqrt(jnp.maximum(norm2, eps * eps))  # == 1 / max(|n|, eps)
    normal = normal * inv

    dss_ref[0] = d
    nss_ref[0] = normal


def distance_forward(pss, first, coef, maxl, grids, eps=1e-5):
    """pss: (B, 3, N); first/coef/maxl: (B, 3); grids: (B, Gx, Gy, Gz)."""
    B, _, N = pss.shape
    Gx, Gy, Gz = grids.shape[1:]

    # Points stay (B, 3, N): coordinates on sublanes, points lane-dense.
    tile_n = min(512, ((N + 127) // 128) * 128)
    n_pad = ((N + tile_n - 1) // tile_n) * tile_n
    pts = jnp.pad(pss.astype(jnp.float32), ((0, 0), (0, 0), (0, n_pad - N)))

    prm = jnp.stack([first, coef, maxl], axis=-1).astype(jnp.float32)  # (B,3,3)

    # Precompute the four (di, dj)-shifted xy-row tables, z on sublanes:
    #   tab[b, m*Gz + z, x*Gy + y] = grids[b, x+di_m, y+dj_m, z],  m = di*2+dj
    # (wrapped rows from the roll are never selected: base indices <= Gdim-2).
    g = grids.astype(jnp.float32)
    shifted = []
    for di in range(2):
        for dj in range(2):
            s = jnp.roll(jnp.roll(g, -di, axis=1), -dj, axis=2)
            shifted.append(s.reshape(B, Gx * Gy, Gz))
    tab = jnp.stack(shifted, axis=1)                      # (B, 4, Gx*Gy, Gz)
    tab = jnp.transpose(tab, (0, 1, 3, 2)).reshape(B, 4 * Gz, Gx * Gy)

    kernel = functools.partial(_distance_kernel, gx_dim=Gx, gy_dim=Gy,
                               gz_dim=Gz, eps=eps)

    dss_k, nss_k = pl.pallas_call(
        kernel,
        out_shape=(
            jax.ShapeDtypeStruct((B, 1, n_pad), jnp.float32),
            jax.ShapeDtypeStruct((B, 3, n_pad), jnp.float32),
        ),
        grid_spec=pltpu.PrefetchScalarGridSpec(
            num_scalar_prefetch=0,
            grid=(B, n_pad // tile_n),
            in_specs=[
                pl.BlockSpec((1, 3, tile_n), lambda b, t: (b, 0, t)),
                pl.BlockSpec((1, 3, 3), lambda b, t: (b, 0, 0)),
                pl.BlockSpec((1, 4 * Gz, Gx * Gy), lambda b, t: (b, 0, 0)),
            ],
            out_specs=[
                pl.BlockSpec((1, 1, tile_n), lambda b, t: (b, 0, t)),
                pl.BlockSpec((1, 3, tile_n), lambda b, t: (b, 0, t)),
            ],
        ),
        compiler_params=pltpu.CompilerParams(
            dimension_semantics=("parallel", "parallel")),
    )(pts, prm, tab)

    dss = dss_k[:, 0, :N]                                  # (B, N)
    nss = jnp.transpose(nss_k, (0, 2, 1))[:, :N, :]        # (B, N, 3)
    loss = -jnp.sum(jnp.minimum(dss, 0.0))                 # clamp(dss,max=0).sum()*-1
    return dss, nss, loss


def _reference(pss, first, coef, maxl, grids, eps=1e-5):
    """Plain-numpy reference mirroring the PyTorch semantics."""
    p = np.asarray(jnp.transpose(pss, (0, 2, 1)), dtype=np.float64)
    first = np.asarray(first, np.float64)
    coef = np.asarray(coef, np.float64)
    maxl = np.asarray(maxl, np.float64)
    grids = np.asarray(grids, np.float64)
    frac = np.clip(np.minimum((p - first[:, None, :]) * coef[:, None, :],
                              maxl[:, None, :]), 0.0, None)
    fl = np.floor(frac)
    f = frac - fl
    i0 = fl.astype(np.int64)
    B, N, _ = p.shape
    c = np.zeros((2, 2, 2, B, N))
    for i in range(2):
        for j in range(2):
            for k in range(2):
                for b in range(B):
                    c[i, j, k, b] = grids[b, i0[b, :, 0] + i,
                                          i0[b, :, 1] + j, i0[b, :, 2] + k]
    fx, fy, fz = f[..., 0], f[..., 1], f[..., 2]
    wx = [1 - fx, fx]; wy = [1 - fy, fy]; wz = [1 - fz, fz]
    d = np.zeros((B, N)); gx = np.zeros((B, N)); gy = np.zeros((B, N)); gz = np.zeros((B, N))
    for i in range(2):
        for j in range(2):
            for k in range(2):
                d += wx[i] * wy[j] * wz[k] * c[i, j, k]
    for a in range(2):
        for b in range(2):
            gz += wx[a] * wy[b] * (c[a, b, 1] - c[a, b, 0])
            gy += wx[a] * wz[b] * (c[a, 1, b] - c[a, 0, b])
            gx += wy[a] * wz[b] * (c[1, a, b] - c[0, a, b])
    nrm = np.stack([gx, gy, gz], axis=2)
    nss = nrm / np.maximum(np.linalg.norm(nrm, axis=2, keepdims=True), eps)
    loss = -np.minimum(d, 0.0).sum()
    return d, nss, loss


if __name__ == "__main__":
    key = jax.random.PRNGKey(0)
    B, N, G = 2, 8, 8
    k1, k2 = jax.random.split(key)

    # Query points (B, 3, N) — the module transposes them internally.
    pss = jax.random.uniform(k1, (B, 3, N), jnp.float32, -1.2, 1.2)
    # Deterministic synthetic SDF "grids" + affine grid params.
    grids = jax.random.normal(k2, (B, G, G, G), jnp.float32)
    first = jnp.full((B, 3), -1.0, jnp.float32)
    coef = jnp.full((B, 3), (G - 1) / 2.0, jnp.float32)
    maxl = jnp.full((B, 3), float(G - 1) - 1e-3, jnp.float32)

    dss, nss, loss = distance_forward(pss, first, coef, maxl, grids)
    jax.block_until_ready((dss, nss, loss))

    dref, nref, lref = _reference(pss, first, coef, maxl, grids)
    assert np.allclose(np.asarray(dss), dref, atol=1e-4), "dss mismatch"
    assert np.allclose(np.asarray(nss), nref, atol=1e-4), "nss mismatch"
    assert np.allclose(float(loss), lref, atol=1e-4), "loss mismatch"

    print("KERNEL_OK")
</pallas_src>

<mosaic_0001>
module attributes {stable_mosaic.version = 11 : i64} {
  func.func @_distance_kernel(%arg0: i32, %arg1: i32, %arg2: memref<1x3x128xf32, #tpu.memory_space<vmem>>, %arg3: memref<1x3x3xf32, #tpu.memory_space<vmem>>, %arg4: memref<1x32x64xf32, #tpu.memory_space<vmem>>, %arg5: memref<1x1x128xf32, #tpu.memory_space<vmem>>, %arg6: memref<1x3x128xf32, #tpu.memory_space<vmem>>) attributes {dimension_semantics = [#tpu.dimension_semantics<parallel>, #tpu.dimension_semantics<parallel>], iteration_bounds = array<i64: 2, 1>, scalar_prefetch = 0 : i64, scratch_operands = 0 : i64, tpu.core_type = #tpu.core_type<tc>, window_params = [{transform_indices = @transform_0, window_bounds = array<i64: 1, 3, 128>}, {transform_indices = @transform_1, window_bounds = array<i64: 1, 3, 3>}, {transform_indices = @transform_2, window_bounds = array<i64: 1, 32, 64>}, {transform_indices = @transform_3, window_bounds = array<i64: 1, 1, 128>}, {transform_indices = @transform_4, window_bounds = array<i64: 1, 3, 128>}]} {
    %c0 = arith.constant 0 : index
    %c0_0 = arith.constant 0 : index
    %c0_1 = arith.constant 0 : index
    %0 = vector.load %arg2[%c0, %c0_0, %c0_1] : memref<1x3x128xf32, #tpu.memory_space<vmem>>, vector<1x3x128xf32>
    %1 = vector.shape_cast %0 : vector<1x3x128xf32> to vector<3x128xf32>
    %c0_2 = arith.constant 0 : index
    %c0_3 = arith.constant 0 : index
    %c0_4 = arith.constant 0 : index
    %2 = vector.load %arg3[%c0_2, %c0_3, %c0_4] : memref<1x3x3xf32, #tpu.memory_space<vmem>>, vector<1x3x3xf32>
    %3 = vector.shape_cast %2 : vector<1x3x3xf32> to vector<3x3xf32>
    %c0_5 = arith.constant 0 : index
    %c0_6 = arith.constant 0 : index
    %c0_7 = arith.constant 0 : index
    %4 = vector.load %arg4[%c0_5, %c0_6, %c0_7] : memref<1x32x64xf32, #tpu.memory_space<vmem>>, vector<1x32x64xf32>
    %5 = vector.shape_cast %4 : vector<1x32x64xf32> to vector<32x64xf32>
    %6 = vector.extract_strided_slice %3 {offsets = [0, 0], sizes = [3, 1], strides = [1, 1]} : vector<3x3xf32> to vector<3x1xf32>
    %7 = vector.extract_strided_slice %3 {offsets = [0, 1], sizes = [3, 1], strides = [1, 1]} : vector<3x3xf32> to vector<3x1xf32>
    %8 = vector.extract_strided_slice %3 {offsets = [0, 2], sizes = [3, 1], strides = [1, 1]} : vector<3x3xf32> to vector<3x1xf32>
    %9 = vector.broadcast %6 : vector<3x1xf32> to vector<3x128xf32>
    %10 = arith.subf %1, %9 : vector<3x128xf32>
    %11 = vector.broadcast %7 : vector<3x1xf32> to vector<3x128xf32>
    %12 = arith.mulf %10, %11 : vector<3x128xf32>
    %13 = vector.broadcast %8 : vector<3x1xf32> to vector<3x128xf32>
    %14 = arith.minimumf %12, %13 : vector<3x128xf32>
    %cst = arith.constant 0.000000e+00 : f32
    %15 = vector.broadcast %cst : f32 to vector<3x128xf32>
    %16 = arith.maximumf %14, %15 : vector<3x128xf32>
    %17 = math.floor %16 : vector<3x128xf32>
    %18 = vector.extract_strided_slice %17 {offsets = [0, 0], sizes = [1, 128], strides = [1, 1]} : vector<3x128xf32> to vector<1x128xf32>
    %cst_8 = arith.constant 0.000000e+00 : f32
    %cst_9 = arith.constant 6.000000e+00 : f32
    %19 = vector.broadcast %cst_8 : f32 to vector<1x128xf32>
    %20 = arith.maximumf %19, %18 : vector<1x128xf32>
    %21 = vector.broadcast %cst_9 : f32 to vector<1x128xf32>
    %22 = arith.minimumf %21, %20 : vector<1x128xf32>
    %23 = vector.extract_strided_slice %17 {offsets = [1, 0], sizes = [1, 128], strides = [1, 1]} : vector<3x128xf32> to vector<1x128xf32>
    %cst_10 = arith.constant 0.000000e+00 : f32
    %cst_11 = arith.constant 6.000000e+00 : f32
    %24 = vector.broadcast %cst_10 : f32 to vector<1x128xf32>
    %25 = arith.maximumf %24, %23 : vector<1x128xf32>
    %26 = vector.broadcast %cst_11 : f32 to vector<1x128xf32>
    %27 = arith.minimumf %26, %25 : vector<1x128xf32>
    %28 = vector.extract_strided_slice %17 {offsets = [2, 0], sizes = [1, 128], strides = [1, 1]} : vector<3x128xf32> to vector<1x128xf32>
    %cst_12 = arith.constant 0.000000e+00 : f32
    %cst_13 = arith.constant 6.000000e+00 : f32
    %29 = vector.broadcast %cst_12 : f32 to vector<1x128xf32>
    %30 = arith.maximumf %29, %28 : vector<1x128xf32>
    %31 = vector.broadcast %cst_13 : f32 to vector<1x128xf32>
    %32 = arith.minimumf %31, %30 : vector<1x128xf32>
    %33 = vector.extract_strided_slice %16 {offsets = [0, 0], sizes = [1, 128], strides = [1, 1]} : vector<3x128xf32> to vector<1x128xf32>
    %34 = arith.subf %33, %22 : vector<1x128xf32>
    %35 = vector.extract_strided_slice %16 {offsets = [1, 0], sizes = [1, 128], strides = [1, 1]} : vector<3x128xf32> to vector<1x128xf32>
    %36 = arith.subf %35, %27 : vector<1x128xf32>
    %37 = vector.extract_strided_slice %16 {offsets = [2, 0], sizes = [1, 128], strides = [1, 1]} : vector<3x128xf32> to vector<1x128xf32>
    %38 = arith.subf %37, %32 : vector<1x128xf32>
    %39 = arith.fptosi %22 : vector<1x128xf32> to vector<1x128xi32>
    %40 = arith.fptosi %27 : vector<1x128xf32> to vector<1x128xi32>
    %41 = arith.fptosi %32 : vector<1x128xf32> to vector<1x128xi32>
    %c8_i32 = arith.constant 8 : i32
    %42 = vector.broadcast %c8_i32 : i32 to vector<1x128xi32>
    %43 = arith.muli %39, %42 : vector<1x128xi32>
    %44 = arith.addi %43, %40 : vector<1x128xi32>
    %45 = tpu.iota {dimensions = array<i32: 0>} : vector<64x128xi32>
    %46 = vector.broadcast %44 : vector<1x128xi32> to vector<64x128xi32>
    %47 = arith.cmpi eq, %45, %46 : vector<64x128xi32>
    %48 = arith.extui %47 : vector<64x128xi1> to vector<64x128xi32>
    %49 = arith.sitofp %48 : vector<64x128xi32> to vector<64x128xf32>
    %cst_14 = arith.constant dense<0.000000e+00> : vector<32x128xf32>
    %50 = tpu.matmul %5, %49, %cst_14 {dimension_numbers = #tpu.dot_dimension_numbers<[1], [0], [0], [1], [0, 0, 1, 1], [], []>} : vector<32x64xf32>, vector<64x128xf32>, vector<32x128xf32> -> vector<32x128xf32>
    %51 = tpu.iota {dimensions = array<i32: 0>} : vector<8x128xi32>
    %52 = vector.broadcast %41 : vector<1x128xi32> to vector<8x128xi32>
    %53 = arith.cmpi eq, %51, %52 : vector<8x128xi32>
    %54 = arith.extui %53 : vector<8x128xi1> to vector<8x128xi32>
    %55 = arith.sitofp %54 : vector<8x128xi32> to vector<8x128xf32>
    %c1_i32 = arith.constant 1 : i32
    %56 = vector.broadcast %c1_i32 : i32 to vector<1x128xi32>
    %57 = arith.addi %41, %56 : vector<1x128xi32>
    %58 = vector.broadcast %57 : vector<1x128xi32> to vector<8x128xi32>
    %59 = arith.cmpi eq, %51, %58 : vector<8x128xi32>
    %60 = arith.extui %59 : vector<8x128xi1> to vector<8x128xi32>
    %61 = arith.sitofp %60 : vector<8x128xi32> to vector<8x128xf32>
    %62 = vector.extract_strided_slice %50 {offsets = [0, 0], sizes = [8, 128], strides = [1, 1]} : vector<32x128xf32> to vector<8x128xf32>
    %63 = arith.mulf %62, %55 : vector<8x128xf32>
    %cst_15 = arith.constant dense<0.000000e+00> : vector<128xf32>
    %64 = vector.multi_reduction <add>, %63, %cst_15 [0] : vector<8x128xf32> to vector<128xf32>
    %65 = vector.shape_cast %64 : vector<128xf32> to vector<1x128xf32>
    %66 = arith.mulf %62, %61 : vector<8x128xf32>
    %cst_16 = arith.constant dense<0.000000e+00> : vector<128xf32>
    %67 = vector.multi_reduction <add>, %66, %cst_16 [0] : vector<8x128xf32> to vector<128xf32>
    %68 = vector.shape_cast %67 : vector<128xf32> to vector<1x128xf32>
    %69 = vector.extract_strided_slice %50 {offsets = [8, 0], sizes = [8, 128], strides = [1, 1]} : vector<32x128xf32> to vector<8x128xf32>
    %70 = arith.mulf %69, %55 : vector<8x128xf32>
    %cst_17 = arith.constant dense<0.000000e+00> : vector<128xf32>
    %71 = vector.multi_reduction <add>, %70, %cst_17 [0] : vector<8x128xf32> to vector<128xf32>
    %72 = vector.shape_cast %71 : vector<128xf32> to vector<1x128xf32>
    %73 = arith.mulf %69, %61 : vector<8x128xf32>
    %cst_18 = arith.constant dense<0.000000e+00> : vector<128xf32>
    %74 = vector.multi_reduction <add>, %73, %cst_18 [0] : vector<8x128xf32> to vector<128xf32>
    %75 = vector.shape_cast %74 : vector<128xf32> to vector<1x128xf32>
    %76 = vector.extract_strided_slice %50 {offsets = [16, 0], sizes = [8, 128], strides = [1, 1]} : vector<32x128xf32> to vector<8x128xf32>
    %77 = arith.mulf %76, %55 : vector<8x128xf32>
    %cst_19 = arith.constant dense<0.000000e+00> : vector<128xf32>
    %78 = vector.multi_reduction <add>, %77, %cst_19 [0] : vector<8x128xf32> to vector<128xf32>
    %79 = vector.shape_cast %78 : vector<128xf32> to vector<1x128xf32>
    %80 = arith.mulf %76, %61 : vector<8x128xf32>
    %cst_20 = arith.constant dense<0.000000e+00> : vector<128xf32>
    %81 = vector.multi_reduction <add>, %80, %cst_20 [0] : vector<8x128xf32> to vector<128xf32>
    %82 = vector.shape_cast %81 : vector<128xf32> to vector<1x128xf32>
    %83 = vector.extract_strided_slice %50 {offsets = [24, 0], sizes = [8, 128], strides = [1, 1]} : vector<32x128xf32> to vector<8x128xf32>
    %84 = arith.mulf %83, %55 : vector<8x128xf32>
    %cst_21 = arith.constant dense<0.000000e+00> : vector<128xf32>
    %85 = vector.multi_reduction <add>, %84, %cst_21 [0] : vector<8x128xf32> to vector<128xf32>
    %86 = vector.shape_cast %85 : vector<128xf32> to vector<1x128xf32>
    %87 = arith.mulf %83, %61 : vector<8x128xf32>
    %cst_22 = arith.constant dense<0.000000e+00> : vector<128xf32>
    %88 = vector.multi_reduction <add>, %87, %cst_22 [0] : vector<8x128xf32> to vector<128xf32>
    %89 = vector.shape_cast %88 : vector<128xf32> to vector<1x128xf32>
    %cst_23 = arith.constant 1.000000e+00 : f32
    %90 = vector.broadcast %cst_23 : f32 to vector<1x128xf32>
    %91 = arith.subf %90, %34 : vector<1x128xf32>
    %cst_24 = arith.constant 1.000000e+00 : f32
    %92 = vector.broadcast %cst_24 : f32 to vector<1x128xf32>
    %93 = arith.subf %92, %36 : vector<1x128xf32>
    %cst_25 = arith.constant 1.000000e+00 : f32
    %94 = vector.broadcast %cst_25 : f32 to vector<1x128xf32>
    %95 = arith.subf %94, %38 : vector<1x128xf32>
    %cst_26 = arith.constant 0.000000e+00 : f32
    %96 = vector.broadcast %cst_26 : f32 to vector<1x128xf32>
    %97 = arith.mulf %91, %93 : vector<1x128xf32>
    %98 = arith.mulf %97, %95 : vector<1x128xf32>
    %99 = arith.mulf %98, %65 : vector<1x128xf32>
    %100 = arith.addf %96, %99 : vector<1x128xf32>
    %101 = arith.mulf %91, %93 : vector<1x128xf32>
    %102 = arith.mulf %101, %38 : vector<1x128xf32>
    %103 = arith.mulf %102, %68 : vector<1x128xf32>
    %104 = arith.addf %100, %103 : vector<1x128xf32>
    %105 = arith.mulf %91, %36 : vector<1x128xf32>
    %106 = arith.mulf %105, %95 : vector<1x128xf32>
    %107 = arith.mulf %106, %72 : vector<1x128xf32>
    %108 = arith.addf %104, %107 : vector<1x128xf32>
    %109 = arith.mulf %91, %36 : vector<1x128xf32>
    %110 = arith.mulf %109, %38 : vector<1x128xf32>
    %111 = arith.mulf %110, %75 : vector<1x128xf32>
    %112 = arith.addf %108, %111 : vector<1x128xf32>
    %113 = arith.mulf %34, %93 : vector<1x128xf32>
    %114 = arith.mulf %113, %95 : vector<1x128xf32>
    %115 = arith.mulf %114, %79 : vector<1x128xf32>
    %116 = arith.addf %112, %115 : vector<1x128xf32>
    %117 = arith.mulf %34, %93 : vector<1x128xf32>
    %118 = arith.mulf %117, %38 : vector<1x128xf32>
    %119 = arith.mulf %118, %82 : vector<1x128xf32>
    %120 = arith.addf %116, %119 : vector<1x128xf32>
    %121 = arith.mulf %34, %36 : vector<1x128xf32>
    %122 = arith.mulf %121, %95 : vector<1x128xf32>
    %123 = arith.mulf %122, %86 : vector<1x128xf32>
    %124 = arith.addf %120, %123 : vector<1x128xf32>
    %125 = arith.mulf %34, %36 : vector<1x128xf32>
    %126 = arith.mulf %125, %38 : vector<1x128xf32>
    %127 = arith.mulf %126, %89 : vector<1x128xf32>
    %128 = arith.addf %124, %127 : vector<1x128xf32>
    %cst_27 = arith.constant 0.000000e+00 : f32
    %129 = vector.broadcast %cst_27 : f32 to vector<1x128xf32>
    %cst_28 = arith.constant 0.000000e+00 : f32
    %130 = vector.broadcast %cst_28 : f32 to vector<1x128xf32>
    %cst_29 = arith.constant 0.000000e+00 : f32
    %131 = vector.broadcast %cst_29 : f32 to vector<1x128xf32>
    %132 = arith.mulf %91, %93 : vector<1x128xf32>
    %133 = arith.subf %68, %65 : vector<1x128xf32>
    %134 = arith.mulf %132, %133 : vector<1x128xf32>
    %135 = arith.addf %131, %134 : vector<1x128xf32>
    %136 = arith.mulf %91, %95 : vector<1x128xf32>
    %137 = arith.subf %72, %65 : vector<1x128xf32>
    %138 = arith.mulf %136, %137 : vector<1x128xf32>
    %139 = arith.addf %130, %138 : vector<1x128xf32>
    %140 = arith.mulf %93, %95 : vector<1x128xf32>
    %141 = arith.subf %79, %65 : vector<1x128xf32>
    %142 = arith.mulf %140, %141 : vector<1x128xf32>
    %143 = arith.addf %129, %142 : vector<1x128xf32>
    %144 = arith.mulf %91, %36 : vector<1x128xf32>
    %145 = arith.subf %75, %72 : vector<1x128xf32>
    %146 = arith.mulf %144, %145 : vector<1x128xf32>
    %147 = arith.addf %135, %146 : vector<1x128xf32>
    %148 = arith.mulf %91, %38 : vector<1x128xf32>
    %149 = arith.subf %75, %68 : vector<1x128xf32>
    %150 = arith.mulf %148, %149 : vector<1x128xf32>
    %151 = arith.addf %139, %150 : vector<1x128xf32>
    %152 = arith.mulf %93, %38 : vector<1x128xf32>
    %153 = arith.subf %82, %68 : vector<1x128xf32>
    %154 = arith.mulf %152, %153 : vector<1x128xf32>
    %155 = arith.addf %143, %154 : vector<1x128xf32>
    %156 = arith.mulf %34, %93 : vector<1x128xf32>
    %157 = arith.subf %82, %79 : vector<1x128xf32>
    %158 = arith.mulf %156, %157 : vector<1x128xf32>
    %159 = arith.addf %147, %158 : vector<1x128xf32>
    %160 = arith.mulf %34, %95 : vector<1x128xf32>
    %161 = arith.subf %86, %79 : vector<1x128xf32>
    %162 = arith.mulf %160, %161 : vector<1x128xf32>
    %163 = arith.addf %151, %162 : vector<1x128xf32>
    %164 = arith.mulf %36, %95 : vector<1x128xf32>
    %165 = arith.subf %86, %72 : vector<1x128xf32>
    %166 = arith.mulf %164, %165 : vector<1x128xf32>
    %167 = arith.addf %155, %166 : vector<1x128xf32>
    %168 = arith.mulf %34, %36 : vector<1x128xf32>
    %169 = arith.subf %89, %86 : vector<1x128xf32>
    %170 = arith.mulf %168, %169 : vector<1x128xf32>
    %171 = arith.addf %159, %170 : vector<1x128xf32>
    %172 = arith.mulf %34, %38 : vector<1x128xf32>
    %173 = arith.subf %89, %82 : vector<1x128xf32>
    %174 = arith.mulf %172, %173 : vector<1x128xf32>
    %175 = arith.addf %163, %174 : vector<1x128xf32>
    %176 = arith.mulf %36, %38 : vector<1x128xf32>
    %177 = arith.subf %89, %75 : vector<1x128xf32>
    %178 = arith.mulf %176, %177 : vector<1x128xf32>
    %179 = arith.addf %167, %178 : vector<1x128xf32>
    %180 = tpu.concatenate %179, %175, %171 in 0 : vector<1x128xf32>, vector<1x128xf32>, vector<1x128xf32> -> vector<3x128xf32>
    %181 = arith.mulf %179, %179 : vector<1x128xf32>
    %182 = arith.mulf %175, %175 : vector<1x128xf32>
    %183 = arith.addf %181, %182 : vector<1x128xf32>
    %184 = arith.mulf %171, %171 : vector<1x128xf32>
    %185 = arith.addf %183, %184 : vector<1x128xf32>
    %cst_30 = arith.constant 1.000000e-10 : f32
    %186 = vector.broadcast %cst_30 : f32 to vector<1x128xf32>
    %187 = arith.maximumf %185, %186 : vector<1x128xf32>
    %188 = math.rsqrt %187 : vector<1x128xf32>
    %189 = vector.broadcast %188 : vector<1x128xf32> to vector<3x128xf32>
    %190 = arith.mulf %180, %189 : vector<3x128xf32>
    %c0_31 = arith.constant 0 : index
    %c0_32 = arith.constant 0 : index
    %c0_33 = arith.constant 0 : index
    %191 = vector.load %arg5[%c0_31, %c0_32, %c0_33] : memref<1x1x128xf32, #tpu.memory_space<vmem>>, vector<1x1x128xf32>
    %192 = vector.shape_cast %191 : vector<1x1x128xf32> to vector<1x128xf32>
    %193 = vector.shape_cast %128 : vector<1x128xf32> to vector<1x1x128xf32>
    tpu.vector_store %arg5[%c0_31, %c0_32, %c0_33], %193 {strides = array<i32>} : memref<1x1x128xf32, #tpu.memory_space<vmem>>, vector<1x1x128xf32>,
    %c0_34 = arith.constant 0 : index
    %c0_35 = arith.constant 0 : index
    %c0_36 = arith.constant 0 : index
    %194 = vector.load %arg6[%c0_34, %c0_35, %c0_36] : memref<1x3x128xf32, #tpu.memory_space<vmem>>, vector<1x3x128xf32>
    %195 = vector.shape_cast %194 : vector<1x3x128xf32> to vector<3x128xf32>
    %196 = vector.shape_cast %190 : vector<3x128xf32> to vector<1x3x128xf32>
    tpu.vector_store %arg6[%c0_34, %c0_35, %c0_36], %196 {strides = array<i32>} : memref<1x3x128xf32, #tpu.memory_space<vmem>>, vector<1x3x128xf32>,
    return
  }
  func.func @transform_0(%arg0: i32, %arg1: i32) -> (i32, i32, i32) {
    %c0_i32 = arith.constant 0 : i32
    %c0_i32_0 = arith.constant 0 : i32
    return %arg0, %c0_i32, %arg1 : i32, i32, i32
  }
  func.func @transform_1(%arg0: i32, %arg1: i32) -> (i32, i32, i32) {
    %c0_i32 = arith.constant 0 : i32
    %c0_i32_0 = arith.constant 0 : i32
    %c0_i32_1 = arith.constant 0 : i32
    return %arg0, %c0_i32, %c0_i32_0 : i32, i32, i32
  }
  func.func @transform_2(%arg0: i32, %arg1: i32) -> (i32, i32, i32) {
    %c0_i32 = arith.constant 0 : i32
    %c0_i32_0 = arith.constant 0 : i32
    %c0_i32_1 = arith.constant 0 : i32
    return %arg0, %c0_i32, %c0_i32_0 : i32, i32, i32
  }
  func.func @transform_3(%arg0: i32, %arg1: i32) -> (i32, i32, i32) {
    %c0_i32 = arith.constant 0 : i32
    %c0_i32_0 = arith.constant 0 : i32
    return %arg0, %c0_i32, %arg1 : i32, i32, i32
  }
  func.func @transform_4(%arg0: i32, %arg1: i32) -> (i32, i32, i32) {
    %c0_i32 = arith.constant 0 : i32
    %c0_i32_0 = arith.constant 0 : i32
    return %arg0, %c0_i32, %arg1 : i32, i32, i32
  }
}

</mosaic_0001>

<llo_original>
// kernel: tpu_custom_call.1
$region0: #{tpu_custom_call.1}
  #allocation0 [shape = 'u32[]', space=smem, size = 0x4, offset = 0x4, fixed_abs, tag = 'smem constant byte address 0x4 - core index']
  #allocation1 [shape = 'u32[144,128]{1,0:T(1,128)}', space=vmem, size = 0x12000, scoped, tag = 'internal scratch']
  %s0 = inlined_call_operand.vmem [shape: f32[2,3,128], index: 0, kind: input, shape index: {}]
  %s1 = inlined_call_operand.vmem [shape: f32[2,3,3], index: 1, kind: input, shape index: {}]
  %s2 = inlined_call_operand.hbm [shape: f32[2,32,64], index: 2, kind: input, shape index: {}]
  %s3 = inlined_call_operand.hbm [shape: f32[2,1,128], index: 3, kind: output, shape index: {0}]
  %s4 = inlined_call_operand.vmem [shape: f32[2,3,128], index: 4, kind: output, shape index: {1}]
  %5 = xla_tuple %s3, %s4
  %s6 = sld [smem:[#allocation0]]
  $region57: #{tpu_custom_call.1} parent=0
    _
  %s8 = ssub.s32 1, %s6
  %s9 = scalar_select 0, %s8, %s6
  $region1: #{tpu_custom_call.1} parent=0
    #allocation2 [shape = 'u8[32768]{0}', space=vmem, size = 0x8000, scoped, tag = 'input window, operand 2']
    #allocation3 [shape = 's32[2]{0}', space=sflag, size = 0x8, scoped, tag = 'scoped memory for tpu_custom_call.1']
    #allocation4 [shape = 's32[2]{0}', space=sflag, size = 0x8, scoped, tag = 'scoped memory for tpu_custom_call.1']
    #allocation5 [shape = 'u8[1024]{0}', space=vmem, size = 0x400, scoped, tag = 'output window, operand 0']
    %10 = vsyncpa [#allocation3], 0
    %s11 = scalar_lea.sflag [#allocation3], 1
    %12 = vsyncpa %s11, 0
    %13 = vsyncpa [#allocation4], 0
    %s14 = scalar_lea.sflag [#allocation4], 1
    %15 = vsyncpa %s14, 0
    loop: start=0, step=1, limit=4
    $region2: #{tpu_custom_call.1} parent=1 // loop_pre_header
      _
    $region3: #{tpu_custom_call.1} parent=1 // loop_header
      %s17 = sphi 0, %s21
      %p18 = scmp.ge.s32.totalorder %s17, 4
      %s24 = sphi 0, %s36
      %s25 = sphi 0, %s32
      %s26 = sphi 0, %s24
      %s27 = sphi 0, %s25
      %s28 = sphi 0, %s26
      %s29 = sphi 0, %s27
      %s41 = sphi 0, %s43
      %s44 = sphi 0, %s41
      %s45 = sphi 0, %s44
      %s61 = sphi 0, %s45
      %s67 = sphi 0, %s69
      %s70 = sphi 0, %s67
      %s71 = sphi 0, %s70
      %s87 = sphi 0, %s71
      %s93 = sphi 0, %s95
      %s96 = sphi 0, %s93
      %s97 = sphi 0, %s96
      %s113 = sphi 0, %s97
      %s121 = sphi 0, %s123
      %s124 = sphi 0, %s121
      %s125 = sphi 0, %s124
      %s141 = sphi 0, %s125
      %s149 = sphi 0, %s151
      %s152 = sphi 0, %s149
      %s153 = sphi 0, %s152
      %s169 = sphi 0, %s153
    $region4: #{tpu_custom_call.1} parent=1 // loop_header_branch
      %20 = sbr.rel (%p18) target = $region8
    $region5: #{tpu_custom_call.1} parent=1 // loop_body
      %s22 = ssub.s32 %s17, 1
      %s23 = ssub.s32 %s17, 2
      %s30 = sadd.s32 1, %s25
      %p31 = scmp.ge.s32.totalorder %s30, 1
      %s32 = scalar_select %p31, 0, %s30
      %s33 = sadd.s32 1, %s24
      %s34 = scalar_select %p31, %s33, %s24
      %p35 = scmp.ge.s32.totalorder %s34, 2
      %s36 = scalar_select %p35, 0, %s34
      %s37 = ssub.s32 %s24, %s36
      %s38 = ssub.s32 %s25, %s32
      %s39 = sor.u32 %s37, %s38
      %p40 = scmp.eq.s32.totalorder %s39, 0
      %s42 = sadd.s32 %s41, 1
      %s43 = scalar_select %p40, %s41, %s42
      %p46 = pneg %p40
      %p47 = scmp.eq.s32.totalorder %s17, 1
      %p48 = por %p46, %p47
      %p49 = scmp.ne.s32.totalorder %s41, %s44
      %p50 = scmp.eq.s32.totalorder %s17, 0
      %p51 = por %p49, %p50
      %p52 = scmp.ne.s32.totalorder %s41, %s44
      %p53 = scmp.eq.s32.totalorder %s22, 1
      %p54 = por %p52, %p53
      %p55 = scmp.ne.s32.totalorder %s44, %s45
      %p56 = scmp.eq.s32.totalorder %s22, 0
      %p57 = por %p55, %p56
      %p58 = scmp.ne.s32.totalorder %s44, %s45
      %p59 = scmp.eq.s32.totalorder %s23, 1
      %p60 = por %p58, %p59
      %p62 = scmp.ne.s32.totalorder %s45, %s61
      %p63 = scmp.eq.s32.totalorder %s23, 0
      %p64 = por %p62, %p63
      %s65 = ssub.s32 %s24, %s36
      %p66 = scmp.eq.s32.totalorder %s65, 0
      %s68 = sadd.s32 %s67, 1
      %s69 = scalar_select %p66, %s67, %s68
      %p72 = pneg %p66
      %p73 = scmp.eq.s32.totalorder %s17, 1
      %p74 = por %p72, %p73
      %p75 = scmp.ne.s32.totalorder %s67, %s70
      %p76 = scmp.eq.s32.totalorder %s17, 0
      %p77 = por %p75, %p76
      %p78 = scmp.ne.s32.totalorder %s67, %s70
      %p79 = scmp.eq.s32.totalorder %s22, 1
      %p80 = por %p78, %p79
      %p81 = scmp.ne.s32.totalorder %s70, %s71
      %p82 = scmp.eq.s32.totalorder %s22, 0
      %p83 = por %p81, %p82
      %p84 = scmp.ne.s32.totalorder %s70, %s71
      %p85 = scmp.eq.s32.totalorder %s23, 1
      %p86 = por %p84, %p85
      %p88 = scmp.ne.s32.totalorder %s71, %s87
      %p89 = scmp.eq.s32.totalorder %s23, 0
      %p90 = por %p88, %p89
      %s91 = ssub.s32 %s24, %s36
      %p92 = scmp.eq.s32.totalorder %s91, 0
      %s94 = sadd.s32 %s93, 1
      %s95 = scalar_select %p92, %s93, %s94
      %p98 = pneg %p92
      %p99 = scmp.eq.s32.totalorder %s17, 1
      %p100 = por %p98, %p99
      %p101 = scmp.ne.s32.totalorder %s93, %s96
      %p102 = scmp.eq.s32.totalorder %s17, 0
      %p103 = por %p101, %p102
      %p104 = scmp.ne.s32.totalorder %s93, %s96
      %p105 = scmp.eq.s32.totalorder %s22, 1
      %p106 = por %p104, %p105
      %p107 = scmp.ne.s32.totalorder %s96, %s97
      %p108 = scmp.eq.s32.totalorder %s22, 0
      %p109 = por %p107, %p108
      %p110 = scmp.ne.s32.totalorder %s96, %s97
      %p111 = scmp.eq.s32.totalorder %s23, 1
      %p112 = por %p110, %p111
      %p114 = scmp.ne.s32.totalorder %s97, %s113
      %p115 = scmp.eq.s32.totalorder %s23, 0
      %p116 = por %p114, %p115
      %s117 = ssub.s32 %s24, %s36
      %s118 = ssub.s32 %s25, %s32
      %s119 = sor.u32 %s117, %s118
      %p120 = scmp.eq.s32.totalorder %s119, 0
      %s122 = sadd.s32 %s121, 1
      %s123 = scalar_select %p120, %s121, %s122
      %p126 = pneg %p120
      %p127 = scmp.eq.s32.totalorder %s17, 1
      %p128 = por %p126, %p127
      %p129 = scmp.ne.s32.totalorder %s121, %s124
      %p130 = scmp.eq.s32.totalorder %s17, 0
      %p131 = por %p129, %p130
      %p132 = scmp.ne.s32.totalorder %s121, %s124
      %p133 = scmp.eq.s32.totalorder %s22, 1
      %p134 = por %p132, %p133
      %p135 = scmp.ne.s32.totalorder %s124, %s125
      %p136 = scmp.eq.s32.totalorder %s22, 0
      %p137 = por %p135, %p136
      %p138 = scmp.ne.s32.totalorder %s124, %s125
      %p139 = scmp.eq.s32.totalorder %s23, 1
      %p140 = por %p138, %p139
      %p142 = scmp.ne.s32.totalorder %s125, %s141
      %p143 = scmp.eq.s32.totalorder %s23, 0
      %p144 = por %p142, %p143
      %s145 = ssub.s32 %s24, %s36
      %s146 = ssub.s32 %s25, %s32
      %s147 = sor.u32 %s145, %s146
      %p148 = scmp.eq.s32.totalorder %s147, 0
      %s150 = sadd.s32 %s149, 1
      %s151 = scalar_select %p148, %s149, %s150
      %p154 = pneg %p148
      %p155 = scmp.eq.s32.totalorder %s17, 1
      %p156 = por %p154, %p155
      %p157 = scmp.ne.s32.totalorder %s149, %s152
      %p158 = scmp.eq.s32.totalorder %s17, 0
      %p159 = por %p157, %p158
      %p160 = scmp.ne.s32.totalorder %s149, %s152
      %p161 = scmp.eq.s32.totalorder %s22, 1
      %p162 = por %p160, %p161
      %p163 = scmp.ne.s32.totalorder %s152, %s153
      %p164 = scmp.eq.s32.totalorder %s22, 0
      %p165 = por %p163, %p164
      %p166 = scmp.ne.s32.totalorder %s152, %s153
      %p167 = scmp.eq.s32.totalorder %s23, 1
      %p168 = por %p166, %p167
      %p170 = scmp.ne.s32.totalorder %s153, %s169
      %p171 = scmp.eq.s32.totalorder %s23, 0
      %p172 = por %p170, %p171
      %p173 = scmp.le.s32.totalorder 1, %s17
      %p174 = scmp.lt.s32.totalorder %s17, 3
      %p175 = pnand %p173, %p174
      %p176 = pneg %p175
      // Predicated region
      $region9: #{tpu_custom_call.1} parent=5 // pred_check
        _
      $region10: #{tpu_custom_call.1} parent=5 // pred_check_branch
        %178 = sbr.rel (%p175) target = $region12
      $region11: #{tpu_custom_call.1} parent=5 // pred_region
        %s179 = ssub.s32 %s17, 1
      $region12: #{tpu_custom_call.1} parent=5 // pred_fallthru
        _
      %p180 = scmp.lt.s32.totalorder %s17, 2
      // Predicated region
      $region13: #{tpu_custom_call.1} parent=5 // pred_check
        %p181 = pneg %p180
      $region14: #{tpu_custom_call.1} parent=5 // pred_check_branch
        %183 = sbr.rel (%p181) target = $region16
      $region15: #{tpu_custom_call.1} parent=5 // pred_region
        // Predicated region
        $region17: #{tpu_custom_call.1} parent=15 // pred_check
          %p184 = pneg %p51
        $region18: #{tpu_custom_call.1} parent=15 // pred_check_branch
          %186 = sbr.rel (%p184) target = $region20
        $region19: #{tpu_custom_call.1} parent=15 // pred_region
          %p187 = scmp.lt.s32.totalorder %s24, 1
          %s188 = scalar_select %p187, %s24, 1
          %p189 = scmp.lt.s32.totalorder %s25, 0
          %s190 = scalar_select %p189, %s25, 0
          %s191 = sadd.s32 %s190, %s188
          %s192 = smul.addr %s191, 4
          %s193 = scalar_lea.vmem %s0, %s192
        $region20: #{tpu_custom_call.1} parent=15 // pred_fallthru
          _
        // Predicated region
        $region21: #{tpu_custom_call.1} parent=15 // pred_check
          %p194 = pneg %p77
        $region22: #{tpu_custom_call.1} parent=15 // pred_check_branch
          %196 = sbr.rel (%p194) target = $region24
        $region23: #{tpu_custom_call.1} parent=15 // pred_region
          %p197 = scmp.lt.s32.totalorder %s24, 1
          %s198 = scalar_select %p197, %s24, 1
          %s199 = smul.addr %s198, 4
          %s200 = scalar_lea.vmem %s1, %s199
        $region24: #{tpu_custom_call.1} parent=15 // pred_fallthru
          _
        // Predicated region
        $region25: #{tpu_custom_call.1} parent=15 // pred_check
          %p201 = pneg %p103
        $region26: #{tpu_custom_call.1} parent=15 // pred_check_branch
          %203 = sbr.rel (%p201) target = $region28
        $region27: #{tpu_custom_call.1} parent=15 // pred_region
          %s204 = sand.u32 %s93, 1
          %s205 = scalar_lea.sflag [#allocation3], %s204
          %s206 = sand.u32 %s93, 1
          %s207 = smul.addr %s206, 32
          %s208 = scalar_lea.vmem [#allocation2], %s207
          %s210 = ssub.s32 512, 512
          %211 = vsyncadd %s205, %s210
          %s212 = smul.addr %s24, 4
          %s213 = smul.addr %s212, 128
          %s214 = scalar_lea.hbm %s2, %s213
          %s215 = sshll.u32 %s208, 4
          %s216 = int_to_ptr.vmem [resolvable:$true] %s215
          %221 = dma.hbm_to_vmem [thread:$0]  %s214, 512, %s216, %s205, 128, 128, 8
        $region28: #{tpu_custom_call.1} parent=15 // pred_fallthru
          _
      $region16: #{tpu_custom_call.1} parent=5 // pred_fallthru
        _
      %p222 = scmp.le.s32.totalorder 1, %s17
      %p223 = scmp.lt.s32.totalorder %s17, 3
      %p224 = pnand %p222, %p223
      %p225 = pneg %p224
      // Predicated region
      $region29: #{tpu_custom_call.1} parent=5 // pred_check
        _
      $region30: #{tpu_custom_call.1} parent=5 // pred_check_branch
        %227 = sbr.rel (%p224) target = $region32
      $region31: #{tpu_custom_call.1} parent=5 // pred_region
        %s228 = ssub.s32 %s17, 1
        %s229 = sand.u32 %s96, 1
        %s230 = scalar_lea.sflag [#allocation3], %s229
        %s231 = sand.u32 %s96, 1
        %s232 = smul.addr %s231, 32
        %s233 = scalar_lea.vmem [#allocation2], %s232
        // Predicated region
        $region33: #{tpu_custom_call.1} parent=31 // pred_check
          %p234 = pneg %p109
        $region34: #{tpu_custom_call.1} parent=31 // pred_check_branch
          %236 = sbr.rel (%p234) target = $region36
        $region35: #{tpu_custom_call.1} parent=31 // pred_region
          %237 = dma.done %s230, 512
        $region36: #{tpu_custom_call.1} parent=31 // pred_fallthru
          _
        %p238 = scmp.lt.s32.totalorder %s26, 1
        %s239 = scalar_select %p238, %s26, 1
        %p240 = scmp.lt.s32.totalorder %s27, 0
        %s241 = scalar_select %p240, %s27, 0
        %s242 = sadd.s32 %s241, %s239
        %s243 = smul.addr %s242, 4
        %s244 = scalar_lea.vmem %s0, %s243
        %p245 = pneg %p57
        %p246 = pneg %p54
        %p247 = scmp.lt.s32.totalorder %s26, 1
        %s248 = scalar_select %p247, %s26, 1
        %s249 = smul.addr %s248, 4
        %s250 = scalar_lea.vmem %s1, %s249
        %p251 = pneg %p83
        %p252 = pneg %p80
        %s253 = sand.u32 %s96, 1
        %s254 = scalar_lea.sflag [#allocation3], %s253
        %s255 = sand.u32 %s96, 1
        %s256 = smul.addr %s255, 32
        %s257 = scalar_lea.vmem [#allocation2], %s256
        %p258 = pneg %p109
        %p259 = pneg %p106
        %p260 = pneg %p137
        %p261 = pneg %p134
        %s262 = sand.u32 %s124, 1
        %s263 = scalar_lea.sflag [#allocation4], %s262
        %s264 = sand.u32 %s124, 1
        %s265 = scalar_lea.vmem [#allocation5], %s264
        %p266 = pneg %p165
        %p267 = pneg %p162
        %p268 = scmp.lt.s32.totalorder %s26, 1
        %s269 = scalar_select %p268, %s26, 1
        %p270 = scmp.lt.s32.totalorder %s27, 0
        %s271 = scalar_select %p270, %s27, 0
        %s272 = sadd.s32 %s271, %s269
        %s273 = smul.addr %s272, 4
        %s274 = scalar_lea.vmem %s4, %s273
        %p275 = scmp.lt.s32.totalorder %s26, 1
        %s276 = scalar_select %p275, %s26, 1
        %p277 = scmp.lt.s32.totalorder %s27, 0
        %s278 = scalar_select %p277, %s27, 0
        %s279 = sadd.s32 %s278, %s276
        %s280 = smul.addr %s279, 4
        %s281 = scalar_lea.vmem %s0, %s280
        %p282 = scmp.lt.s32.totalorder %s26, 1
        %s283 = scalar_select %p282, %s26, 1
        %s284 = smul.addr %s283, 4
        %s285 = scalar_lea.vmem %s1, %s284
        %p286 = scmp.lt.s32.totalorder %s26, 1
        %s287 = scalar_select %p286, %s26, 1
        %p288 = scmp.lt.s32.totalorder %s27, 0
        %s289 = scalar_select %p288, %s27, 0
        %s290 = sadd.s32 %s289, %s287
        %s291 = smul.addr %s290, 4
        %s292 = scalar_lea.vmem %s4, %s291
        %v293 = vld [vmem:[%s281] sm:$0x7]
        %v294 = vld [vmem:[%s285] sm:$0x7]
        %v295 = vld [vmem:[%s233] sm:$0xff]
        %v296 = vld [vmem:[%s233 + $0x8] sm:$0xff]
        %v297 = vld [vmem:[%s233 + $0x10] sm:$0xff]
        %v298 = vld [vmem:[%s233 + $0x18] sm:$0xff]
        %300 = vset.pattern.permute.xlu0 0
        %301 = vperm.xlu0 %300, %v294
        %v302 = vpop.permute.xlu0 %301
        %v304 = vsub.f32 %v293, %v302
        %305 = vset.pattern.permute.xlu0 1
        %306 = vperm.xlu0 %305, %v294
        %v307 = vpop.permute.xlu0 %306
        %v309 = vmul.f32 %v304, %v307
        %310 = vset.pattern.permute.xlu0 2
        %311 = vperm.xlu0 %310, %v294
        %v312 = vpop.permute.xlu0 %311
        %v314 = vmin.f32 %v309, %v312
        %v315 = vmax.f32 %v314, 0.0
        %v316 = vfloor.f32 %v315
        %v317 = vmax.f32 %v316, 0.0
        %v318 = vmin.f32 %v317, 6.0
        %v319 = vsub.f32 %v315, %v318
        %v320 = vcvt.f32.s32.to.zero.pseudo %v318
        %v321 = vmul.u32 %v320, 8
        %v322 = vrot.slane %v320, 1
        %v323 = vadd.s32 %v321, %v322
        %v324 = vlaneseq
        %v325 = vshrl.u32 %v324, 7
        %v326 = vadd.s32 %v325, 8
        %v327 = vadd.s32 %v325, 16
        %v328 = vadd.s32 %v325, 24
        %v329 = vadd.s32 %v325, 32
        %v330 = vadd.s32 %v325, 40
        %v331 = vadd.s32 %v325, 48
        %v332 = vadd.s32 %v325, 56
        %v333 = vlaneseq
        %v334 = vshrl.u32 %v333, 7
        %v335 = vsub.s32 0, %v334
        %v336 = vrot.slane %v323, %v335
        %vm337 = vcmp.eq.s32.totalorder %v325, %v336
        %vm338 = vcmp.eq.s32.totalorder %v326, %v336
        %vm339 = vcmp.eq.s32.totalorder %v327, %v336
        %vm340 = vcmp.eq.s32.totalorder %v328, %v336
        %vm341 = vcmp.eq.s32.totalorder %v329, %v336
        %vm342 = vcmp.eq.s32.totalorder %v330, %v336
        %vm343 = vcmp.eq.s32.totalorder %v331, %v336
        %vm344 = vcmp.eq.s32.totalorder %v332, %v336
        %v345 = vsel %vm337, 1, 0
        %v346 = vsel %vm338, 1, 0
        %v347 = vsel %vm339, 1, 0
        %v348 = vsel %vm340, 1, 0
        %v349 = vsel %vm341, 1, 0
        %v350 = vsel %vm342, 1, 0
        %v351 = vsel %vm343, 1, 0
        %v352 = vsel %vm344, 1, 0
        %v353 = vcvt.s32.f32 %v345
        %v354 = vcvt.s32.f32 %v346
        %v355 = vcvt.s32.f32 %v347
        %v356 = vcvt.s32.f32 %v348
        %v357 = vcvt.s32.f32 %v349
        %v358 = vcvt.s32.f32 %v350
        %v359 = vcvt.s32.f32 %v351
        %v360 = vcvt.s32.f32 %v352
        %vm361 = vcmask 523264
        %v363 = vsel %vm361, %v295, 0
        %v366 = vsel %vm361, %v296, 0
        %v369 = vsel %vm361, %v297, 0
        %v372 = vsel %vm361, %v298, 0
        %374 = vmatprep.subr.mxu0 0.0
        %375 = vmatpush1.msra.mxu0 %v353
        %376 = vmatprep.subr.mxu0 0.0
        %377 = vmatpush1.msra.mxu0 %v354
        %378 = vmatprep.subr.mxu0 0.0
        %379 = vmatpush1.msra.mxu0 %v355
        %380 = vmatprep.subr.mxu0 0.0
        %381 = vmatpush1.msra.mxu0 %v356
        %382 = vmatprep.subr.mxu0 0.0
        %383 = vmatpush1.msra.mxu0 %v357
        %384 = vmatprep.subr.mxu0 0.0
        %385 = vmatpush1.msra.mxu0 %v358
        %386 = vmatprep.subr.mxu0 0.0
        %387 = vmatpush1.msra.mxu0 %v359
        %388 = vmatprep.subr.mxu0 0.0
        %389 = vmatpush1.msra.mxu0 %v360
        %390 = vmatprep.subr.mxu0 0.0
        %391 = vmatpush1.msra.mxu0 0.0
        %392 = vmatprep.subr.mxu0 0.0
        %393 = vmatpush1.msra.mxu0 0.0
        %394 = vmatprep.subr.mxu0 0.0
        %395 = vmatpush1.msra.mxu0 0.0
        %396 = vmatprep.subr.mxu0 0.0
        %397 = vmatpush1.msra.mxu0 0.0
        %398 = vmatprep.subr.mxu0 0.0
        %399 = vmatpush1.msra.mxu0 0.0
        %400 = vmatprep.subr.mxu0 0.0
        %401 = vmatpush1.msra.mxu0 0.0
        %402 = vmatprep.subr.mxu0 0.0
        %403 = vmatpush1.msra.mxu0 0.0
        %404 = vmatprep.subr.mxu0 0.0
        %405 = vmatpush1.msra.mxu0 0.0
        %406 = vmatprep.subr.mxu0 0.0
        %407 = vmatpush1.msra.mxu0 0.0
        %408 = vmatprep.subr.mxu0 0.0
        %409 = vmatpush1.msra.mxu0 0.0
        %410 = vmatprep.subr.mxu0 0.0
        %411 = vmatpush1.msra.mxu0 0.0
        %412 = vmatprep.subr.mxu0 0.0
        %413 = vmatpush1.msra.mxu0 0.0
        %414 = vmatprep.subr.mxu0 0.0
        %415 = vmatpush1.msra.mxu0 0.0
        %416 = vmatprep.subr.mxu0 0.0
        %417 = vmatpush1.msra.mxu0 0.0
        %418 = vmatprep.subr.mxu0 0.0
        %419 = vmatpush1.msra.mxu0 0.0
        %420 = vmatprep.subr.mxu0 0.0
        %421 = vmatpush1.msra.mxu0 0.0
        %422 = vmatprep.subr.mxu0 0.0
        %423 = vmatpush1.msra.mxu0 0.0
        %424 = vmatprep.subr.mxu0 0.0
        %425 = vmatpush1.msra.mxu0 0.0
        %426 = vmatprep.subr.mxu0 0.0
        %427 = vmatpush1.msra.mxu0 0.0
        %428 = vmatprep.subr.mxu0 0.0
        %429 = vmatpush1.msra.mxu0 0.0
        %430 = vmatprep.subr.mxu0 0.0
        %431 = vmatpush1.msra.mxu0 0.0
        %432 = vmatprep.subr.mxu0 0.0
        %433 = vmatpush1.msra.mxu0 0.0
        %434 = vmatprep.subr.mxu0 0.0
        %435 = vmatpush1.msra.mxu0 0.0
        %436 = vmatprep.subr.mxu0 0.0
        %437 = vmatpush1.msra.mxu0 0.0
        %438 = vmatprep.mubr.f32.mxu0 0.0
        %439 = vmatmul.mubr.f32.gmra.mrb[0].mxu0 %v363
        %v440 = vpop.f32.mrb[0].mxu0
        %v441 = vadd.f32 0.0, %v440
        %v442 = vpop.f32.mrb[0].mxu0
        %443 = vmatprep.mubr.f32.mxu0 0.0
        %444 = vmatmul.mubr.f32.gmra.mrb[0].mxu0 %v366
        %v445 = vpop.f32.mrb[0].mxu0
        %v446 = vadd.f32 0.0, %v445
        %v447 = vpop.f32.mrb[0].mxu0
        %448 = vmatprep.mubr.f32.mxu0 0.0
        %449 = vmatmul.mubr.f32.gmra.mrb[0].mxu0 %v369
        %v450 = vpop.f32.mrb[0].mxu0
        %v451 = vadd.f32 0.0, %v450
        %v452 = vpop.f32.mrb[0].mxu0
        %453 = vmatprep.mubr.f32.mxu0 0.0
        %454 = vmatmul.mubr.f32.gmra.mrb[0].mxu0 %v372
        %v455 = vpop.f32.mrb[0].mxu0
        %v456 = vadd.f32 0.0, %v455
        %v457 = vpop.f32.mrb[0].mxu0
        %458 = vdwg.mxu0
        %v459 = vlaneseq
        %v460 = vshrl.u32 %v459, 7
        %v461 = vsub.s32 2, %v460
        %v462 = vrot.slane %v320, %v461
        %vm463 = vcmp.eq.s32.totalorder %v325, %v462
        %v464 = vsel %vm463, 1, 0
        %v465 = vcvt.s32.f32 %v464
        %v466 = vadd.s32 %v320, 1
        %v467 = vlaneseq
        %v468 = vshrl.u32 %v467, 7
        %v469 = vsub.s32 2, %v468
        %v470 = vrot.slane %v466, %v469
        %vm471 = vcmp.eq.s32.totalorder %v325, %v470
        %v472 = vsel %vm471, 1, 0
        %v473 = vcvt.s32.f32 %v472
        %v474 = vmul.f32 %v441, %v465
        %v475 = vrot.slane %v474, 4
        %v476 = vadd.f32 %v474, %v475
        %v477 = vrot.slane %v476, 2
        %v478 = vadd.f32 %v476, %v477
        %v479 = vrot.slane %v478, 1
        %v480 = vadd.f32 %v478, %v479
        %v481 = vmul.f32 %v441, %v473
        %v482 = vrot.slane %v481, 4
        %v483 = vadd.f32 %v481, %v482
        %v484 = vrot.slane %v483, 2
        %v485 = vadd.f32 %v483, %v484
        %v486 = vrot.slane %v485, 1
        %v487 = vadd.f32 %v485, %v486
        %v488 = vmul.f32 %v446, %v465
        %v489 = vrot.slane %v488, 4
        %v490 = vadd.f32 %v488, %v489
        %v491 = vrot.slane %v490, 2
        %v492 = vadd.f32 %v490, %v491
        %v493 = vrot.slane %v492, 1
        %v494 = vadd.f32 %v492, %v493
        %v495 = vmul.f32 %v446, %v473
        %v496 = vrot.slane %v495, 4
        %v497 = vadd.f32 %v495, %v496
        %v498 = vrot.slane %v497, 2
        %v499 = vadd.f32 %v497, %v498
        %v500 = vrot.slane %v499, 1
        %v501 = vadd.f32 %v499, %v500
        %v502 = vmul.f32 %v451, %v465
        %v503 = vrot.slane %v502, 4
        %v504 = vadd.f32 %v502, %v503
        %v505 = vrot.slane %v504, 2
        %v506 = vadd.f32 %v504, %v505
        %v507 = vrot.slane %v506, 1
        %v508 = vadd.f32 %v506, %v507
        %v509 = vmul.f32 %v451, %v473
        %v510 = vrot.slane %v509, 4
        %v511 = vadd.f32 %v509, %v510
        %v512 = vrot.slane %v511, 2
        %v513 = vadd.f32 %v511, %v512
        %v514 = vrot.slane %v513, 1
        %v515 = vadd.f32 %v513, %v514
        %v516 = vmul.f32 %v456, %v465
        %v517 = vrot.slane %v516, 4
        %v518 = vadd.f32 %v516, %v517
        %v519 = vrot.slane %v518, 2
        %v520 = vadd.f32 %v518, %v519
        %v521 = vrot.slane %v520, 1
        %v522 = vadd.f32 %v520, %v521
        %v523 = vmul.f32 %v456, %v473
        %v524 = vrot.slane %v523, 4
        %v525 = vadd.f32 %v523, %v524
        %v526 = vrot.slane %v525, 2
        %v527 = vadd.f32 %v525, %v526
        %v528 = vrot.slane %v527, 1
        %v529 = vadd.f32 %v527, %v528
        %v530 = vsub.f32 1.0, %v319
        %v532 = vrot.slane %v530, 1
        %v534 = vmul.f32 %v530, %v532
        %v535 = vrot.slane %v530, 2
        %v537 = vmul.f32 %v534, %v535
        %v538 = vmul.f32 %v537, %v480
        %v539 = vadd.f32 %v538, 0.0
        %v541 = vrot.slane %v319, 2
        %v543 = vmul.f32 %v534, %v541
        %v544 = vmul.f32 %v543, %v487
        %v545 = vadd.f32 %v539, %v544
        %v546 = vrot.slane %v319, 1
        %v548 = vmul.f32 %v530, %v546
        %v549 = vmul.f32 %v548, %v535
        %v550 = vmul.f32 %v549, %v494
        %v551 = vadd.f32 %v545, %v550
        %v552 = vmul.f32 %v548, %v541
        %v553 = vmul.f32 %v552, %v501
        %v554 = vadd.f32 %v551, %v553
        %v555 = vmul.f32 %v319, %v532
        %v556 = vmul.f32 %v555, %v535
        %v557 = vmul.f32 %v556, %v508
        %v558 = vadd.f32 %v554, %v557
        %v559 = vmul.f32 %v555, %v541
        %v560 = vmul.f32 %v559, %v515
        %v561 = vadd.f32 %v558, %v560
        %v562 = vmul.f32 %v319, %v546
        %v563 = vmul.f32 %v562, %v535
        %v564 = vmul.f32 %v563, %v522
        %v565 = vadd.f32 %v561, %v564
        %v566 = vmul.f32 %v562, %v541
        %v567 = vmul.f32 %v566, %v529
        %v568 = vadd.f32 %v565, %v567
        %v569 = vsub.f32 %v487, %v480
        %v570 = vmul.f32 %v534, %v569
        %v571 = vadd.f32 %v570, 0.0
        %v572 = vmul.f32 %v530, %v535
        %v573 = vsub.f32 %v494, %v480
        %v574 = vmul.f32 %v572, %v573
        %v575 = vadd.f32 %v574, 0.0
        %v576 = vsub.f32 %v508, %v480
        %v577 = vmul.f32 %v534, %v576
        %v578 = vadd.f32 %v577, 0.0
        %v579 = vsub.f32 %v501, %v494
        %v580 = vmul.f32 %v548, %v579
        %v581 = vadd.f32 %v571, %v580
        %v582 = vmul.f32 %v530, %v541
        %v583 = vsub.f32 %v501, %v487
        %v584 = vmul.f32 %v582, %v583
        %v585 = vadd.f32 %v575, %v584
        %v586 = vsub.f32 %v515, %v487
        %v587 = vmul.f32 %v548, %v586
        %v588 = vadd.f32 %v578, %v587
        %v589 = vsub.f32 %v515, %v508
        %v590 = vmul.f32 %v555, %v589
        %v591 = vadd.f32 %v581, %v590
        %v592 = vmul.f32 %v319, %v535
        %v593 = vsub.f32 %v522, %v508
        %v594 = vmul.f32 %v592, %v593
        %v595 = vadd.f32 %v585, %v594
        %v596 = vsub.f32 %v522, %v494
        %v597 = vmul.f32 %v555, %v596
        %v598 = vadd.f32 %v588, %v597
        %v599 = vsub.f32 %v529, %v522
        %v600 = vmul.f32 %v562, %v599
        %v601 = vadd.f32 %v591, %v600
        %v602 = vmul.f32 %v319, %v541
        %v603 = vsub.f32 %v529, %v515
        %v604 = vmul.f32 %v602, %v603
        %v605 = vadd.f32 %v595, %v604
        %v606 = vsub.f32 %v529, %v501
        %v607 = vmul.f32 %v562, %v606
        %v608 = vadd.f32 %v598, %v607
        %v610 = vrot.slane %v608, 1
        %v613 = vrot.slane %v605, 7
        %v616 = vrot.slane %v601, 6
        %vm618 = vcmask 1040384
        %v619 = vsel %vm618, %v610, %v613
        %vm620 = vcmask 1041408
        %v621 = vsel %vm620, %v619, %v616
        %v622 = vmul.f32 %v608, %v608
        %v623 = vmul.f32 %v605, %v605
        %v625 = vrot.slane %v623, 7
        %v627 = vadd.f32 %v622, %v625
        %v628 = vmul.f32 %v601, %v601
        %v630 = vrot.slane %v628, 7
        %v632 = vadd.f32 %v627, %v630
        %v633 = vmax.f32 %v632, 1e-10
        %v634 = vrsqrt.pop %v633
        %v635 = vlaneseq
        %v636 = vshrl.u32 %v635, 7
        %v637 = vsub.s32 1, %v636
        %v638 = vrot.slane %v634, %v637
        %v639 = vmul.f32 %v621, %v638
        %640 = vst [vmem:[%s265] sm:$0x1] %v568
        %641 = vst [vmem:[%s292] sm:$0x7] %v639
        %s642 = sand.u32 %s124, 1
        %s643 = scalar_lea.sflag [#allocation4], %s642
        %s644 = sand.u32 %s124, 1
        %s645 = scalar_lea.vmem [#allocation5], %s644
        %p646 = scmp.lt.s32.totalorder %s26, 1
        %s647 = scalar_select %p646, %s26, 1
        %p648 = scmp.lt.s32.totalorder %s27, 0
        %s649 = scalar_select %p648, %s27, 0
        %s650 = sadd.s32 %s649, %s647
        %s651 = smul.addr %s650, 4
        %s652 = scalar_lea.vmem %s4, %s651
        // Predicated region
        $region37: #{tpu_custom_call.1} parent=31 // pred_check
          %p653 = pneg %p134
        $region38: #{tpu_custom_call.1} parent=31 // pred_check_branch
          %655 = sbr.rel (%p653) target = $region40
        $region39: #{tpu_custom_call.1} parent=31 // pred_region
          %s657 = ssub.s32 16, 16
          %658 = vsyncadd %s643, %s657
          %s659 = sadd.s32 %s27, %s26
          %s660 = smul.addr %s659, 16
          %s661 = scalar_lea.hbm %s3, %s660
          %s663 = sshll.u32 %s645, 4
          %s664 = int_to_ptr.vmem [resolvable:$true] %s663
          %666 = dma.vmem_to_hbm [thread:$0]  %s664, 16, %s661, %s643
        $region40: #{tpu_custom_call.1} parent=31 // pred_fallthru
          _
        // Predicated region
        $region41: #{tpu_custom_call.1} parent=31 // pred_check
          %p667 = pneg %p162
        $region42: #{tpu_custom_call.1} parent=31 // pred_check_branch
          %669 = sbr.rel (%p667) target = $region44
        $region43: #{tpu_custom_call.1} parent=31 // pred_region
          _
        $region44: #{tpu_custom_call.1} parent=31 // pred_fallthru
          _
      $region32: #{tpu_custom_call.1} parent=5 // pred_fallthru
        _
      %p670 = scmp.le.s32.totalorder 2, %s17
      // Predicated region
      $region45: #{tpu_custom_call.1} parent=5 // pred_check
        %p671 = pneg %p670
      $region46: #{tpu_custom_call.1} parent=5 // pred_check_branch
        %673 = sbr.rel (%p671) target = $region48
      $region47: #{tpu_custom_call.1} parent=5 // pred_region
        %s674 = ssub.s32 %s17, 2
        // Predicated region
        $region49: #{tpu_custom_call.1} parent=47 // pred_check
          %p675 = pneg %p140
        $region50: #{tpu_custom_call.1} parent=47 // pred_check_branch
          %677 = sbr.rel (%p675) target = $region52
        $region51: #{tpu_custom_call.1} parent=47 // pred_region
          %s678 = sand.u32 %s125, 1
          %s679 = scalar_lea.sflag [#allocation4], %s678
          %s680 = sand.u32 %s125, 1
          %s681 = scalar_lea.vmem [#allocation5], %s680
          %682 = dma.done %s679, 16
        $region52: #{tpu_custom_call.1} parent=47 // pred_fallthru
          _
        // Predicated region
        $region53: #{tpu_custom_call.1} parent=47 // pred_check
          %p683 = pneg %p168
        $region54: #{tpu_custom_call.1} parent=47 // pred_check_branch
          %685 = sbr.rel (%p683) target = $region56
        $region55: #{tpu_custom_call.1} parent=47 // pred_region
          %p686 = scmp.lt.s32.totalorder %s28, 1
          %s687 = scalar_select %p686, %s28, 1
          %p688 = scmp.lt.s32.totalorder %s29, 0
          %s689 = scalar_select %p688, %s29, 0
          %s690 = sadd.s32 %s689, %s687
          %s691 = smul.addr %s690, 4
          %s692 = scalar_lea.vmem %s4, %s691
        $region56: #{tpu_custom_call.1} parent=47 // pred_fallthru
          _
      $region48: #{tpu_custom_call.1} parent=5 // pred_fallthru
        _
    $region6: #{tpu_custom_call.1} parent=1 // loop_footer
      %s21 = sadd.s32 1, %s17
    $region7: #{tpu_custom_call.1} parent=1 // loop_footer_branch
      %16 = sbr.rel target = $region3
    $region8: #{tpu_custom_call.1} parent=1 // loop_exit
      _
    %693 = vsyncpa [#allocation3], 1
    %s694 = scalar_lea.sflag [#allocation3], 1
    %695 = vsyncpa %s694, 1
    %696 = vsyncpa [#allocation4], 1
    %s697 = scalar_lea.sflag [#allocation4], 1
    %698 = vsyncpa %s697, 1

</llo_original>
